<compile_context>
chip_gen: v7x
topology: tpu7x:2x2x1
jax: 0.10.0
libtpu: 0.0.40
codegen_flags: <defaults>
</compile_context>

<pallas_src>
import math

import jax
import jax.numpy as jnp
from jax.experimental import pallas as pl
from jax.experimental.pallas import tpu as pltpu  # noqa: F401  (TPU backend)


def _flatten_copy_kernel(x_ref, o_ref):
    # Plain lane-dense copy of the (already flattened) 2-D tile.
    o_ref[...] = x_ref[...]


# Per-buffer VMEM budget: 8 MiB keeps in+out double-buffered tiles well
# under v7x's 64 MiB VMEM (and trivially under v5e/v6e's 128 MiB).
_TILE_BUDGET_BYTES = 8 * 1024 * 1024


def flatten(x):
    """Equivalent of torch Flatten: (N, ...) -> (N, prod(rest))."""
    N = x.shape[0]
    K = math.prod(x.shape[1:]) if x.ndim > 1 else 1

    # Metadata-only collapse of the trailing dims (contiguous row-major
    # input); matches torch's x.view(N, -1) bit-exactly.
    x2d = jnp.reshape(x, (N, K))

    itemsize = jnp.dtype(x.dtype).itemsize
    total_bytes = N * K * itemsize

    if total_bytes <= _TILE_BUDGET_BYTES:
        # Single whole-array block, no grid: one unmasked lane-dense copy.
        return pl.pallas_call(
            _flatten_copy_kernel,
            out_shape=jax.ShapeDtypeStruct((N, K), x.dtype),
            in_specs=[pl.BlockSpec((N, K), lambda: (0, 0))],
            out_specs=pl.BlockSpec((N, K), lambda: (0, 0)),
        )(x2d)

    # Row-tiled fallback for large inputs: keep the full K on the lane axis
    # (lane-dense output), tile rows in dtype-correct sublane multiples.
    sublane = {4: 8, 2: 16, 1: 32}.get(itemsize, 8)
    rows_per_tile = max(1, _TILE_BUDGET_BYTES // (K * itemsize))
    tm = max(sublane, (rows_per_tile // sublane) * sublane)
    tm = min(tm, N)
    grid = (pl.cdiv(N, tm),)
    return pl.pallas_call(
        _flatten_copy_kernel,
        out_shape=jax.ShapeDtypeStruct((N, K), x.dtype),
        grid=grid,
        in_specs=[pl.BlockSpec((tm, K), lambda i: (i, 0))],
        out_specs=pl.BlockSpec((tm, K), lambda i: (i, 0)),
    )(x2d)


if __name__ == "__main__":
    key = jax.random.PRNGKey(0)

    # Primary test: shape implied by the original module's typical use.
    N, C, H, W = 2, 4, 16, 16
    x = jax.random.normal(key, (N, C, H, W), dtype=jnp.float32)

    y = flatten(x)
    jax.block_until_ready(y)

    # Reference: exact semantics of torch's x.view(x.size(0), -1) on a
    # contiguous NCHW tensor.
    expected = jnp.reshape(x, (N, -1))
    assert y.shape == (N, C * H * W), (y.shape, (N, C * H * W))
    assert y.dtype == x.dtype
    assert jnp.array_equal(y, expected), "flatten kernel mismatch (f32)"

    # Secondary small test: different dtype / odd trailing size (last dim of
    # the flattened block equals the full array dim, so no tiling constraint
    # is violated).
    key2 = jax.random.PRNGKey(0)
    x2 = jax.random.normal(key2, (2, 3, 8, 8), dtype=jnp.bfloat16)
    y2 = flatten(x2)
    jax.block_until_ready(y2)
    expected2 = jnp.reshape(x2, (2, -1))
    assert y2.shape == (2, 3 * 8 * 8)
    assert y2.dtype == x2.dtype
    assert jnp.array_equal(y2, expected2), "flatten kernel mismatch (bf16)"

    print("KERNEL_OK")
</pallas_src>

<mosaic_0001>
module attributes {stable_mosaic.version = 11 : i64} {
  func.func @_flatten_copy_kernel(%arg0: memref<2x1024xf32, #tpu.memory_space<vmem>>, %arg1: memref<2x1024xf32, #tpu.memory_space<vmem>>) attributes {dimension_semantics = [], scalar_prefetch = 0 : i64, scratch_operands = 0 : i64, tpu.core_type = #tpu.core_type<tc>} {
    %c0 = arith.constant 0 : index
    %c0_0 = arith.constant 0 : index
    %0 = vector.load %arg0[%c0, %c0_0] : memref<2x1024xf32, #tpu.memory_space<vmem>>, vector<2x1024xf32>
    %c0_1 = arith.constant 0 : index
    %c0_2 = arith.constant 0 : index
    %1 = vector.load %arg1[%c0_1, %c0_2] : memref<2x1024xf32, #tpu.memory_space<vmem>>, vector<2x1024xf32>
    tpu.vector_store %arg1[%c0_1, %c0_2], %0 {strides = array<i32>} : memref<2x1024xf32, #tpu.memory_space<vmem>>, vector<2x1024xf32>,
    return
  }
}

</mosaic_0001>

<llo_original>
// kernel: tpu_custom_call.1
$region0: #{tpu_custom_call.1}
  #allocation0 [shape = 'u32[]', space=smem, size = 0x4, offset = 0x4, fixed_abs, tag = 'smem constant byte address 0x4 - core index']
  #allocation1 [shape = 'u32[144,128]{1,0:T(1,128)}', space=vmem, size = 0x12000, scoped, tag = 'internal scratch']
  %s0 = inlined_call_operand.hbm [shape: f32[2,1024], index: 0, kind: input, shape index: {}]
  %s1 = inlined_call_operand.hbm [shape: f32[2,1024], index: 1, kind: output, shape index: {}]
  %s2 = sld [smem:[#allocation0]]
  $region18: #{tpu_custom_call.1} parent=0
    _
  %s4 = ssub.s32 1, %s2
  %s5 = scalar_select 0, %s4, %s2
  $region1: #{tpu_custom_call.1} parent=0
    #allocation2 [shape = 'u8[8192]{0}', space=vmem, size = 0x2000, scoped, tag = 'input window, operand 0, single buffered']
    #allocation3 [shape = 's32[1]{0}', space=sflag, size = 0x4, scoped, tag = 'scoped memory for tpu_custom_call.1']
    #allocation4 [shape = 's32[1]{0}', space=sflag, size = 0x4, scoped, tag = 'scoped memory for tpu_custom_call.1']
    #allocation5 [shape = 'u8[8192]{0}', space=vmem, size = 0x2000, scoped, tag = 'output window, operand 0, single buffered']
    %6 = vsyncpa [#allocation3], 0
    %7 = vsyncpa [#allocation4], 0
    // Predicated region
    $region2: #{tpu_custom_call.1} parent=1 // pred_check
      _
    $region3: #{tpu_custom_call.1} parent=1 // pred_check_branch
      %9 = sbr.rel (0) target = $region5
    $region4: #{tpu_custom_call.1} parent=1 // pred_region
      %s11 = ssub.s32 256, 256
      %12 = vsyncadd [#allocation3], %s11
      %s14 = sshll.u32 [#allocation2], 4
      %s15 = int_to_ptr.vmem [resolvable:$true] %s14
      %17 = dma.hbm_to_vmem [thread:$0]  %s0, 256, %s15, [#allocation3]
    $region5: #{tpu_custom_call.1} parent=1 // pred_fallthru
      _
    // Predicated region
    $region6: #{tpu_custom_call.1} parent=1 // pred_check
      _
    $region7: #{tpu_custom_call.1} parent=1 // pred_check_branch
      %19 = sbr.rel (0) target = $region9
    $region8: #{tpu_custom_call.1} parent=1 // pred_region
      %20 = dma.done [#allocation3], 256
    $region9: #{tpu_custom_call.1} parent=1 // pred_fallthru
      _
    %v21 = vld [vmem:[#allocation2] sm:$0xff]
    %v22 = vld [vmem:[#allocation2 + $0x8] sm:$0xff]
    %23 = vst [vmem:[#allocation5] sm:$0xff] %v21
    %24 = vst [vmem:[#allocation5 + $0x8] sm:$0xff] %v22
    // Predicated region
    $region10: #{tpu_custom_call.1} parent=1 // pred_check
      _
    $region11: #{tpu_custom_call.1} parent=1 // pred_check_branch
      %26 = sbr.rel (0) target = $region13
    $region12: #{tpu_custom_call.1} parent=1 // pred_region
      %s28 = ssub.s32 256, 256
      %29 = vsyncadd [#allocation4], %s28
      %s31 = sshll.u32 [#allocation5], 4
      %s32 = int_to_ptr.vmem [resolvable:$true] %s31
      %34 = dma.vmem_to_hbm [thread:$0]  %s32, 256, %s1, [#allocation4]
    $region13: #{tpu_custom_call.1} parent=1 // pred_fallthru
      _
    // Predicated region
    $region14: #{tpu_custom_call.1} parent=1 // pred_check
      _
    $region15: #{tpu_custom_call.1} parent=1 // pred_check_branch
      %36 = sbr.rel (0) target = $region17
    $region16: #{tpu_custom_call.1} parent=1 // pred_region
      %37 = dma.done [#allocation4], 256
    $region17: #{tpu_custom_call.1} parent=1 // pred_fallthru
      _
    %38 = vsyncpa [#allocation3], 1
    %39 = vsyncpa [#allocation4], 1

</llo_original>
